<compile_context>
chip_gen: v7x
topology: tpu7x:2x2x1
jax: 0.10.0
libtpu: 0.0.40
codegen_flags: <defaults>
</compile_context>

<pallas_src>
import jax
import jax.numpy as jnp
from jax.experimental import pallas as pl
from jax.experimental.pallas import tpu as pltpu

LANES = 128      # vreg lane width
SUBLANES = 8     # f32 vreg sublane count
MAX_TILE_ROWS = 2048          # 2048 x 128 x 4B = 1 MiB input tile
TILE_BYTES_TARGET = 1 << 20   # ~1 MiB per input tile for the generic path


# ----------------------------------------------------------------------------
# D == 1 fast path: y = w0 * x + b, samples packed as (rows, 128) full vregs.
# ----------------------------------------------------------------------------
def _d1_kernel(w_ref, b_ref, x_ref, o_ref):
    # w_ref : (1,) SMEM   — scalar weight
    # b_ref : (1,) SMEM   — scalar bias
    # x_ref : (r_tile, 128) VMEM — samples packed sublanes x lanes
    # o_ref : (r_tile, 128) VMEM — same packing, unmasked full-vreg stores
    o_ref[...] = (x_ref[...] * w_ref[0] + b_ref[0]).astype(o_ref.dtype)


def _d1_forward(x_flat, w, b):
    N = x_flat.shape[0]

    rows = max(pl.cdiv(N, LANES), SUBLANES)          # sublane-rows of samples
    if rows > 2 * SUBLANES:
        # Split into >= 2 tiles (v7x has 2 TensorCores), capped at ~1 MiB/tile.
        r_tile = min(MAX_TILE_ROWS,
                     pl.cdiv(pl.cdiv(rows, 2), SUBLANES) * SUBLANES)
    else:
        r_tile = pl.cdiv(rows, SUBLANES) * SUBLANES  # single small tile
    rows_pad = pl.cdiv(rows, r_tile) * r_tile
    n_pad = rows_pad * LANES

    # (N,) -> (rows_pad, 128): the reshape is free; only the tail pad copies.
    if n_pad != N:
        x_flat = jnp.pad(x_flat, (0, n_pad - N))
    x2d = x_flat.reshape(rows_pad, LANES)

    out = pl.pallas_call(
        _d1_kernel,
        out_shape=jax.ShapeDtypeStruct((rows_pad, LANES), jnp.float32),
        grid_spec=pltpu.PrefetchScalarGridSpec(
            num_scalar_prefetch=0,
            grid=(rows_pad // r_tile,),
            in_specs=[
                pl.BlockSpec(memory_space=pltpu.SMEM),            # weight (1,)
                pl.BlockSpec(memory_space=pltpu.SMEM),            # bias   (1,)
                pl.BlockSpec((r_tile, LANES), lambda i: (i, 0)),  # x slab tile
            ],
            out_specs=pl.BlockSpec((r_tile, LANES), lambda i: (i, 0)),
        ),
        compiler_params=pltpu.CompilerParams(
            dimension_semantics=("parallel",),
        ),
        cost_estimate=pl.CostEstimate(
            flops=2 * N,
            transcendentals=0,
            bytes_accessed=2 * n_pad * 4,
        ),
    )(w, b, x2d)

    return out.reshape(n_pad)[:N]


# ----------------------------------------------------------------------------
# Generic D > 1 fallback: samples on sublanes, features on lanes, lane reduce.
# ----------------------------------------------------------------------------
def _general_kernel(w_ref, b_ref, x_ref, o_ref):
    # w_ref : (1, d_pad) VMEM  — zero-padded weight row (broadcast on sublanes)
    # b_ref : (1,) SMEM        — scalar bias
    # x_ref : (r_tile, d_pad) VMEM — samples x features
    # o_ref : (r_tile, 1) VMEM
    s = jnp.sum(x_ref[...] * w_ref[...], axis=1, keepdims=True)
    o_ref[...] = (s + b_ref[0]).astype(o_ref.dtype)


def _general_forward(x, w, b):
    N, D = x.shape
    d_pad = pl.cdiv(D, LANES) * LANES

    rows = max(N, SUBLANES)
    max_rows = max(SUBLANES,
                   (TILE_BYTES_TARGET // (d_pad * 4)) // SUBLANES * SUBLANES)
    r_tile = min(max_rows, pl.cdiv(rows, SUBLANES) * SUBLANES)
    rows_pad = pl.cdiv(rows, r_tile) * r_tile

    # Zero-pad: padded feature lanes contribute w=0 -> exact result.
    xp = jnp.zeros((rows_pad, d_pad), jnp.float32).at[:N, :D].set(x)
    wp = jnp.zeros((1, d_pad), jnp.float32).at[0, :D].set(w)

    out = pl.pallas_call(
        _general_kernel,
        out_shape=jax.ShapeDtypeStruct((rows_pad, 1), jnp.float32),
        grid_spec=pltpu.PrefetchScalarGridSpec(
            num_scalar_prefetch=0,
            grid=(rows_pad // r_tile,),
            in_specs=[
                pl.BlockSpec((1, d_pad), lambda i: (0, 0)),       # weight row
                pl.BlockSpec(memory_space=pltpu.SMEM),            # bias (1,)
                pl.BlockSpec((r_tile, d_pad), lambda i: (i, 0)),  # x tile
            ],
            out_specs=pl.BlockSpec((r_tile, 1), lambda i: (i, 0)),
        ),
        compiler_params=pltpu.CompilerParams(
            dimension_semantics=("parallel",),
        ),
        cost_estimate=pl.CostEstimate(
            flops=2 * N * D,
            transcendentals=0,
            bytes_accessed=(rows_pad * d_pad + rows_pad + d_pad) * 4,
        ),
    )(wp, b, xp)

    return out[:N, 0]


def regression_forward(x, weight, bias):
    """x: (N, D), weight: (D,), bias: (1,) -> (N,)  (all f32)."""
    x = jnp.asarray(x, jnp.float32)
    N, D = x.shape
    w = jnp.asarray(weight, jnp.float32).reshape(D)
    b = jnp.asarray(bias, jnp.float32).reshape(1)

    if D == 1:
        # (N, 1) -> (N,) is a free bitcast-reshape; no transpose, no (D, N) copy.
        return _d1_forward(x.reshape(N), w, b)
    return _general_forward(x, w, b)


if __name__ == "__main__":
    # The module's dataset: X is (17, 1) -> n_input = 1
    X = jnp.array(
        [[1.0], [1.2], [1.6], [1.78], [2.0], [2.3], [2.4], [3.0], [3.3],
         [4.0], [4.1], [4.12], [4.34], [5.0], [5.3], [5.6], [6.0]],
        dtype=jnp.float32,
    )

    # Deterministic parameter init (module uses torch.empty(...).normal_())
    key = jax.random.PRNGKey(0)
    kw, kb, kx_big, kx_gen = jax.random.split(key, 4)
    n_input = X.shape[1]
    weight = jax.random.normal(kw, (n_input,), dtype=jnp.float32)
    bias = jax.random.normal(kb, (1,), dtype=jnp.float32)

    # 1) The module's own forward: N=17, D=1 -> single (8,128) tile.
    out = jax.block_until_ready(regression_forward(X, weight, bias))
    ref = X @ weight + bias
    assert out.shape == (X.shape[0],)
    assert jnp.allclose(out, ref, atol=1e-5, rtol=1e-5)

    # 2) Multi-tile D=1 path (exercises grid > 1 and the ragged tail pad).
    Xb = jax.random.normal(kx_big, (5000, 1), dtype=jnp.float32)
    outb = jax.block_until_ready(regression_forward(Xb, weight, bias))
    refb = Xb @ weight + bias
    assert jnp.allclose(outb, refb, atol=1e-4, rtol=1e-4)

    # 3) Generic D>1 fallback (vectorized lane reduce, no scalar d-loop).
    Xg = jax.random.normal(kx_gen, (33, 4), dtype=jnp.float32)
    wg = jax.random.normal(kb, (4,), dtype=jnp.float32)
    outg = jax.block_until_ready(regression_forward(Xg, wg, bias))
    refg = Xg @ wg + bias
    assert jnp.allclose(outg, refg, atol=1e-4, rtol=1e-4)

    print("KERNEL_OK")
</pallas_src>

<mosaic_0001>
module attributes {stable_mosaic.version = 11 : i64} {
  func.func @_d1_kernel(%arg0: i32, %arg1: memref<1xf32, #tpu.memory_space<smem>>, %arg2: memref<1xf32, #tpu.memory_space<smem>>, %arg3: memref<8x128xf32, #tpu.memory_space<vmem>>, %arg4: memref<8x128xf32, #tpu.memory_space<vmem>>) attributes {dimension_semantics = [#tpu.dimension_semantics<parallel>], iteration_bounds = array<i64: 1>, scalar_prefetch = 0 : i64, scratch_operands = 0 : i64, tpu.core_type = #tpu.core_type<tc>, window_params = [{transform_indices = @transform_0, window_bounds = array<i64: 1>}, {transform_indices = @transform_1, window_bounds = array<i64: 1>}, {transform_indices = @transform_2, window_bounds = array<i64: 8, 128>}, {transform_indices = @transform_3, window_bounds = array<i64: 8, 128>}]} {
    %c0 = arith.constant 0 : index
    %c0_0 = arith.constant 0 : index
    %0 = vector.load %arg3[%c0, %c0_0] : memref<8x128xf32, #tpu.memory_space<vmem>>, vector<8x128xf32>
    %c0_1 = arith.constant 0 : index
    %1 = memref.load %arg1[%c0_1] : memref<1xf32, #tpu.memory_space<smem>>
    %2 = vector.broadcast %1 : f32 to vector<8x128xf32>
    %3 = arith.mulf %0, %2 : vector<8x128xf32>
    %c0_2 = arith.constant 0 : index
    %4 = memref.load %arg2[%c0_2] : memref<1xf32, #tpu.memory_space<smem>>
    %5 = vector.broadcast %4 : f32 to vector<8x128xf32>
    %6 = arith.addf %3, %5 : vector<8x128xf32>
    %c0_3 = arith.constant 0 : index
    %c0_4 = arith.constant 0 : index
    %7 = vector.load %arg4[%c0_3, %c0_4] : memref<8x128xf32, #tpu.memory_space<vmem>>, vector<8x128xf32>
    tpu.vector_store %arg4[%c0_3, %c0_4], %6 {strides = array<i32>} : memref<8x128xf32, #tpu.memory_space<vmem>>, vector<8x128xf32>,
    return
  }
  func.func @transform_0(%arg0: i32) -> i32 {
    %c0_i32 = arith.constant 0 : i32
    %c0_i32_0 = arith.constant 0 : i32
    return %c0_i32 : i32
  }
  func.func @transform_1(%arg0: i32) -> i32 {
    %c0_i32 = arith.constant 0 : i32
    %c0_i32_0 = arith.constant 0 : i32
    return %c0_i32 : i32
  }
  func.func @transform_2(%arg0: i32) -> (i32, i32) {
    %c0_i32 = arith.constant 0 : i32
    %c0_i32_0 = arith.constant 0 : i32
    return %arg0, %c0_i32 : i32, i32
  }
  func.func @transform_3(%arg0: i32) -> (i32, i32) {
    %c0_i32 = arith.constant 0 : i32
    %c0_i32_0 = arith.constant 0 : i32
    return %arg0, %c0_i32 : i32, i32
  }
}

</mosaic_0001>

<llo_original>
// kernel: tpu_custom_call.1
$region0: #{tpu_custom_call.1}
  #allocation0 [shape = 'u32[]', space=smem, size = 0x4, offset = 0x4, fixed_abs, tag = 'smem constant byte address 0x4 - core index']
  #allocation1 [shape = 'u32[144,128]{1,0:T(1,128)}', space=vmem, size = 0x12000, scoped, tag = 'internal scratch']
  #allocation2 [shape = 'f32[1]{0:T(128)S(6)}', space=smem, size = 0x200, scoped, tag = 'scoped memory for tpu_custom_call.1']
  #allocation3 [shape = 'f32[1]{0:T(128)S(6)}', space=smem, size = 0x200, scoped, tag = 'scoped memory for tpu_custom_call.1']
  %s0 = inlined_call_operand.<no memory space> [shape: f32[1], index: 0, kind: input, shape index: {}]
  %s1 = inlined_call_operand.<no memory space> [shape: f32[1], index: 1, kind: input, shape index: {}]
  %s2 = inlined_call_operand.hbm [shape: f32[8,128], index: 2, kind: input, shape index: {}]
  %s3 = inlined_call_operand.hbm [shape: f32[8,128], index: 3, kind: output, shape index: {}]
  %s4 = sld [smem:[#allocation0]]
  $region26: #{tpu_custom_call.1} parent=0
    _
  %s6 = ssub.s32 1, %s4
  %s7 = scalar_select 0, %s6, %s4
  %8 = sst [smem:[#allocation2]] %s0
  %9 = sst [smem:[#allocation3]] %s1
  $region1: #{tpu_custom_call.1} parent=0
    #allocation4 [shape = 'u8[4096]{0}', space=vmem, size = 0x1000, scoped, tag = 'input window, operand 2, single buffered']
    #allocation5 [shape = 's32[1]{0}', space=sflag, size = 0x4, scoped, tag = 'scoped memory for tpu_custom_call.1']
    #allocation6 [shape = 's32[1]{0}', space=sflag, size = 0x4, scoped, tag = 'scoped memory for tpu_custom_call.1']
    #allocation7 [shape = 'u8[4096]{0}', space=vmem, size = 0x1000, scoped, tag = 'output window, operand 0, single buffered']
    %10 = vsyncpa [#allocation5], 0
    %11 = vsyncpa [#allocation6], 0
    // Predicated region
    $region2: #{tpu_custom_call.1} parent=1 // pred_check
      _
    $region3: #{tpu_custom_call.1} parent=1 // pred_check_branch
      %13 = sbr.rel (0) target = $region5
    $region4: #{tpu_custom_call.1} parent=1 // pred_region
      _
    $region5: #{tpu_custom_call.1} parent=1 // pred_fallthru
      _
    // Predicated region
    $region6: #{tpu_custom_call.1} parent=1 // pred_check
      _
    $region7: #{tpu_custom_call.1} parent=1 // pred_check_branch
      %15 = sbr.rel (0) target = $region9
    $region8: #{tpu_custom_call.1} parent=1 // pred_region
      _
    $region9: #{tpu_custom_call.1} parent=1 // pred_fallthru
      _
    // Predicated region
    $region10: #{tpu_custom_call.1} parent=1 // pred_check
      _
    $region11: #{tpu_custom_call.1} parent=1 // pred_check_branch
      %17 = sbr.rel (0) target = $region13
    $region12: #{tpu_custom_call.1} parent=1 // pred_region
      %s19 = ssub.s32 128, 128
      %20 = vsyncadd [#allocation5], %s19
      %s22 = sshll.u32 [#allocation4], 4
      %s23 = int_to_ptr.vmem [resolvable:$true] %s22
      %25 = dma.hbm_to_vmem [thread:$0]  %s2, 128, %s23, [#allocation5]
    $region13: #{tpu_custom_call.1} parent=1 // pred_fallthru
      _
    // Predicated region
    $region14: #{tpu_custom_call.1} parent=1 // pred_check
      _
    $region15: #{tpu_custom_call.1} parent=1 // pred_check_branch
      %27 = sbr.rel (0) target = $region17
    $region16: #{tpu_custom_call.1} parent=1 // pred_region
      %28 = dma.done [#allocation5], 128
    $region17: #{tpu_custom_call.1} parent=1 // pred_fallthru
      _
    %v29 = vld [vmem:[#allocation4] sm:$0xff]
    %s30 = sld [smem:[#allocation2]]
    %v31 = vstv %s30
    %v32 = vmul.f32 %v29, %v31
    %s33 = sld [smem:[#allocation3]]
    %v34 = vstv %s33
    %v35 = vadd.f32 %v32, %v34
    %36 = vst [vmem:[#allocation7] sm:$0xff] %v35
    // Predicated region
    $region18: #{tpu_custom_call.1} parent=1 // pred_check
      _
    $region19: #{tpu_custom_call.1} parent=1 // pred_check_branch
      %38 = sbr.rel (0) target = $region21
    $region20: #{tpu_custom_call.1} parent=1 // pred_region
      %s40 = ssub.s32 128, 128
      %41 = vsyncadd [#allocation6], %s40
      %s43 = sshll.u32 [#allocation7], 4
      %s44 = int_to_ptr.vmem [resolvable:$true] %s43
      %46 = dma.vmem_to_hbm [thread:$0]  %s44, 128, %s3, [#allocation6]
    $region21: #{tpu_custom_call.1} parent=1 // pred_fallthru
      _
    // Predicated region
    $region22: #{tpu_custom_call.1} parent=1 // pred_check
      _
    $region23: #{tpu_custom_call.1} parent=1 // pred_check_branch
      %48 = sbr.rel (0) target = $region25
    $region24: #{tpu_custom_call.1} parent=1 // pred_region
      %49 = dma.done [#allocation6], 128
    $region25: #{tpu_custom_call.1} parent=1 // pred_fallthru
      _
    %50 = vsyncpa [#allocation5], 1
    %51 = vsyncpa [#allocation6], 1

</llo_original>
